<compile_context>
chip_gen: v5e
topology: v5e:2x2
jax: 0.10.0
libtpu: 0.0.40
codegen_flags: <defaults>
</compile_context>

<pallas_src>
import jax
import jax.numpy as jnp
from jax import lax
from jax.experimental import pallas as pl
from jax.experimental.pallas import tpu as pltpu

RAW_SIZE = 200
FEAT_SIZE = 60
HIDDEN_SIZE = 22
NLAYERS_1 = 4          # -> 5 Linear layers in mlp_raw_to_feat
PRED_HIDDEN = 30       # hidden of mlp_feat_to_pred


# ----------------------------------------------------------------------------
# Kernel factory (captures static N / tile size / step count).
# ----------------------------------------------------------------------------
def _make_meta_kernel(n_rows, tn, nsteps):
    need_mask = (n_rows % tn) != 0
    inv_n = 1.0 / float(n_rows)

    def kernel(x_ref,                       # (tn, RAW) f32 tile of one sample
               w1_ref, b1_ref,              # (RAW, 22) bf16, (22, 1) f32
               wh_ref, bh_ref,              # (3, 22, 22) bf16, (3, 22, 1) f32
               w5_ref, b5_ref,              # (22, 60) f32, (1, 60) f32
               w6_ref, b6_ref,              # (60, 30) f32, (1, 30) f32
               w7t_ref, b7_ref,             # (1, 30) f32, (1, 1) f32
               out_ref,                     # (1, 1) f32
               acc_ref):                    # (22, 1) f32 scratch (per-sample sum)
        j = pl.program_id(1)

        @pl.when(j == 0)
        def _():
            acc_ref[...] = jnp.zeros_like(acc_ref)

        # Cast the streamed f32 tile to bf16 on the VPU (hidden under DMA).
        x = x_ref[...].astype(jnp.bfloat16)                       # (tn, RAW)

        # --- mlp_raw_to_feat, transposed: features on sublanes, rows on lanes.
        # h[c, r] = sum_k W1[k, c] * x[r, k]
        h = lax.dot_general(w1_ref[...], x, (((0,), (1,)), ((), ())),
                            preferred_element_type=jnp.float32)   # (22, tn)
        h = jnp.maximum(h + b1_ref[...], 0.0)

        for i in range(NLAYERS_1 - 1):                            # static unroll
            h = lax.dot_general(wh_ref[i], h.astype(jnp.bfloat16),
                                (((0,), (0,)), ((), ())),
                                preferred_element_type=jnp.float32)
            h = jnp.maximum(h + bh_ref[i], 0.0)                   # (22, tn) f32

        if need_mask:  # zero padded columns of a partial last block (static N)
            col = lax.broadcasted_iota(jnp.int32, h.shape, 1)
            h = jnp.where(j * tn + col < n_rows, h, 0.0)

        # Partial per-sample sum (mean hoisted before W5).
        acc_ref[...] += jnp.sum(h, axis=1, keepdims=True)         # (22, 1)

        # --- finalize: mean, W5, head, sigmoid -- once per sample.
        @pl.when(j == nsteps - 1)
        def _():
            mean_h = acc_ref[...] * inv_n                         # (22, 1)
            # f = mean_h^T @ W5 + b5 via broadcast-mul + sublane reduce -> (1, 60)
            f = jnp.sum(w5_ref[...] * mean_h, axis=0, keepdims=True) + b5_ref[...]
            p = jnp.maximum(
                jnp.dot(f, w6_ref[...], preferred_element_type=jnp.float32)
                + b6_ref[...], 0.0)                               # (1, 30)
            o = jnp.sum(p * w7t_ref[...], axis=1, keepdims=True) + b7_ref[...]
            out_ref[...] = jax.nn.sigmoid(o)                      # (1, 1)

    return kernel


# ----------------------------------------------------------------------------
# Wrapper
# ----------------------------------------------------------------------------
def meta_network_forward(feats, params, *, tn_max=1024):
    """feats: (B, N, RAW) float32; params: list of (W, b) with W (in,out), b (1,out)."""
    B, N, raw = feats.shape
    assert raw == RAW_SIZE
    assert tn_max % 8 == 0

    (w1, b1), (w2, b2), (w3, b3), (w4, b4), (w5, b5), (w6, b6), (w7, b7) = params

    # Row-block tile size: full N when small, otherwise a sublane-aligned block.
    tn = N if N <= tn_max else tn_max
    nsteps = -(-N // tn)

    # Weight prep (tiny, one-time). No pass over feats here.
    w1_bf = w1.astype(jnp.bfloat16)                                       # (200, 22)
    b1_t = b1.reshape(HIDDEN_SIZE, 1)                                     # (22, 1)
    wh = jnp.stack([w2, w3, w4]).astype(jnp.bfloat16)                     # (3, 22, 22)
    bh = jnp.stack([b2.reshape(HIDDEN_SIZE, 1),
                    b3.reshape(HIDDEN_SIZE, 1),
                    b4.reshape(HIDDEN_SIZE, 1)])                          # (3, 22, 1)
    w7t = w7.T                                                            # (1, 30)

    def _const_spec(arr):
        nd = arr.ndim
        return pl.BlockSpec(arr.shape, lambda b, j, nd=nd: (0,) * nd)

    weight_args = [w1_bf, b1_t, wh, bh, w5, b5, w6, b6, w7t, b7]

    in_specs = ([pl.BlockSpec((None, tn, RAW_SIZE), lambda b, j: (b, j, 0))]
                + [_const_spec(a) for a in weight_args])

    out = pl.pallas_call(
        _make_meta_kernel(N, tn, nsteps),
        out_shape=jax.ShapeDtypeStruct((B, 1, 1), jnp.float32),
        grid=(B, nsteps),
        in_specs=in_specs,
        out_specs=pl.BlockSpec((None, 1, 1), lambda b, j: (b, 0, 0)),
        scratch_shapes=[pltpu.VMEM((HIDDEN_SIZE, 1), jnp.float32)],
        compiler_params=pltpu.CompilerParams(
            dimension_semantics=("parallel", "arbitrary"),
            vmem_limit_bytes=32 * 1024 * 1024),
    )(feats, *weight_args)
    return out.reshape(B, 1)


# ----------------------------------------------------------------------------
# Deterministic parameter construction (PyTorch-Linear-like uniform init).
# ----------------------------------------------------------------------------
def _init_linear(key, fan_in, fan_out):
    kw, kb = jax.random.split(key)
    bound = 1.0 / jnp.sqrt(jnp.float32(fan_in))
    w = jax.random.uniform(kw, (fan_in, fan_out), jnp.float32, -bound, bound)
    b = jax.random.uniform(kb, (1, fan_out), jnp.float32, -bound, bound)
    return w, b


def make_params(key):
    dims = ([(RAW_SIZE, HIDDEN_SIZE)]
            + [(HIDDEN_SIZE, HIDDEN_SIZE)] * (NLAYERS_1 - 1)
            + [(HIDDEN_SIZE, FEAT_SIZE)]
            + [(FEAT_SIZE, PRED_HIDDEN), (PRED_HIDDEN, 1)])
    keys = jax.random.split(key, len(dims))
    return [_init_linear(k, i, o) for k, (i, o) in zip(keys, dims)]


# Pure-JAX reference: natural orientation, W5 applied per-row then mean
# (validates both the transposed compute and the mean-before-W5 reorder).
# Mirrors the kernel's bf16 inputs on the raw->feat MXU dots.
def _reference(feats, params):
    (w1, b1), (w2, b2), (w3, b3), (w4, b4), (w5, b5), (w6, b6), (w7, b7) = params
    B, N, _ = feats.shape

    def mm_bf16(a, w):
        return lax.dot(a.astype(jnp.bfloat16), w.astype(jnp.bfloat16),
                       preferred_element_type=jnp.float32)

    with jax.default_matmul_precision("float32"):
        x = feats.reshape(B * N, RAW_SIZE)
        h = jnp.maximum(mm_bf16(x, w1) + b1, 0.0)
        h = jnp.maximum(mm_bf16(h, w2) + b2, 0.0)
        h = jnp.maximum(mm_bf16(h, w3) + b3, 0.0)
        h = jnp.maximum(mm_bf16(h, w4) + b4, 0.0)
        f = jnp.dot(h, w5, preferred_element_type=jnp.float32) + b5     # (B*N, 60)
        m = jnp.mean(f.reshape(B, N, FEAT_SIZE), axis=1)                # (B, 60)
        p = jnp.maximum(jnp.dot(m, w6, preferred_element_type=jnp.float32) + b6, 0.0)
        o = jnp.dot(p, w7, preferred_element_type=jnp.float32) + b7
        return jax.nn.sigmoid(o)


if __name__ == "__main__":
    key = jax.random.PRNGKey(0)
    k_feats, k_feats2, k_rewards, k_params = jax.random.split(key, 4)

    params = make_params(k_params)

    # Case 1: 2 list entries, 8 rows each (single row-block per sample).
    B, N = 2, 8
    feats = jax.random.normal(k_feats, (B, N, RAW_SIZE), jnp.float32)
    # `rewards` exist in the PyTorch forward but never affect the returned score.
    rewards = jax.random.normal(k_rewards, (B,), jnp.float32)  # unused, by design

    out = jax.block_until_ready(meta_network_forward(feats, params))
    ref = _reference(feats, params)
    assert out.shape == (B, 1)
    assert jnp.allclose(out, ref, atol=5e-3), (out, ref)

    # Case 2: exercise the multi-step accumulator path (grid=(2, 3), tn=8).
    feats2 = jax.random.normal(k_feats2, (B, 24, RAW_SIZE), jnp.float32)
    out2 = jax.block_until_ready(meta_network_forward(feats2, params, tn_max=8))
    ref2 = _reference(feats2, params)
    assert jnp.allclose(out2, ref2, atol=5e-3), (out2, ref2)

    print("KERNEL_OK")
</pallas_src>

<mosaic_0001>
module attributes {stable_mosaic.version = 11 : i64} {
  func.func @kernel(%arg0: i32, %arg1: i32, %arg2: memref<1x8x200xf32, #tpu.memory_space<vmem>>, %arg3: memref<200x22xbf16, #tpu.memory_space<vmem>>, %arg4: memref<22x1xf32, #tpu.memory_space<vmem>>, %arg5: memref<3x22x22xbf16, #tpu.memory_space<vmem>>, %arg6: memref<3x22x1xf32, #tpu.memory_space<vmem>>, %arg7: memref<22x60xf32, #tpu.memory_space<vmem>>, %arg8: memref<1x60xf32, #tpu.memory_space<vmem>>, %arg9: memref<60x30xf32, #tpu.memory_space<vmem>>, %arg10: memref<1x30xf32, #tpu.memory_space<vmem>>, %arg11: memref<1x30xf32, #tpu.memory_space<vmem>>, %arg12: memref<1x1xf32, #tpu.memory_space<vmem>>, %arg13: memref<1x1x1xf32, #tpu.memory_space<vmem>>, %arg14: memref<22x1xf32, #tpu.memory_space<vmem>>) attributes {dimension_semantics = [#tpu.dimension_semantics<parallel>, #tpu.dimension_semantics<arbitrary>], iteration_bounds = array<i64: 2, 1>, scalar_prefetch = 0 : i64, scratch_operands = 1 : i64, tpu.core_type = #tpu.core_type<tc>, window_params = [{transform_indices = @transform_0, window_bounds = array<i64: 1, 8, 200>}, {pipeline_mode = #tpu.pipeline_mode<synchronous>, transform_indices = @transform_1, window_bounds = array<i64: 200, 22>}, {pipeline_mode = #tpu.pipeline_mode<synchronous>, transform_indices = @transform_2, window_bounds = array<i64: 22, 1>}, {pipeline_mode = #tpu.pipeline_mode<synchronous>, transform_indices = @transform_3, window_bounds = array<i64: 3, 22, 22>}, {pipeline_mode = #tpu.pipeline_mode<synchronous>, transform_indices = @transform_4, window_bounds = array<i64: 3, 22, 1>}, {pipeline_mode = #tpu.pipeline_mode<synchronous>, transform_indices = @transform_5, window_bounds = array<i64: 22, 60>}, {pipeline_mode = #tpu.pipeline_mode<synchronous>, transform_indices = @transform_6, window_bounds = array<i64: 1, 60>}, {pipeline_mode = #tpu.pipeline_mode<synchronous>, transform_indices = @transform_7, window_bounds = array<i64: 60, 30>}, {pipeline_mode = #tpu.pipeline_mode<synchronous>, transform_indices = @transform_8, window_bounds = array<i64: 1, 30>}, {pipeline_mode = #tpu.pipeline_mode<synchronous>, transform_indices = @transform_9, window_bounds = array<i64: 1, 30>}, {pipeline_mode = #tpu.pipeline_mode<synchronous>, transform_indices = @transform_10, window_bounds = array<i64: 1, 1>}, {transform_indices = @transform_11, window_bounds = array<i64: 1, 1, 1>}]} {
    %c0_i32 = arith.constant 0 : i32
    %0 = arith.cmpi eq, %arg1, %c0_i32 : i32
    %1 = arith.extui %0 : i1 to i32
    %c0_i32_0 = arith.constant 0 : i32
    %2 = arith.cmpi ne, %1, %c0_i32_0 : i32
    scf.if %2 {
      %cst_37 = arith.constant 0.000000e+00 : f32
      %51 = vector.broadcast %cst_37 : f32 to vector<22x1xf32>
      %c0_38 = arith.constant 0 : index
      %c0_39 = arith.constant 0 : index
      %52 = vector.load %arg14[%c0_38, %c0_39] : memref<22x1xf32, #tpu.memory_space<vmem>>, vector<22x1xf32>
      tpu.vector_store %arg14[%c0_38, %c0_39], %51 {strides = array<i32>} : memref<22x1xf32, #tpu.memory_space<vmem>>, vector<22x1xf32>,
    } else {
    }
    %c0 = arith.constant 0 : index
    %c0_1 = arith.constant 0 : index
    %c0_2 = arith.constant 0 : index
    %3 = vector.load %arg2[%c0, %c0_1, %c0_2] : memref<1x8x200xf32, #tpu.memory_space<vmem>>, vector<1x8x200xf32>
    %4 = vector.shape_cast %3 : vector<1x8x200xf32> to vector<8x200xf32>
    %5 = arith.truncf %4 : vector<8x200xf32> to vector<8x200xbf16>
    %c0_3 = arith.constant 0 : index
    %c0_4 = arith.constant 0 : index
    %6 = vector.load %arg3[%c0_3, %c0_4] : memref<200x22xbf16, #tpu.memory_space<vmem>>, vector<200x22xbf16>
    %cst = arith.constant dense<0.000000e+00> : vector<22x8xf32>
    %7 = tpu.matmul %6, %5, %cst {dimension_numbers = #tpu.dot_dimension_numbers<[0], [1], [1], [0], [0, 1, 1, 0], [], []>} : vector<200x22xbf16>, vector<8x200xbf16>, vector<22x8xf32> -> vector<22x8xf32>
    %c0_5 = arith.constant 0 : index
    %c0_6 = arith.constant 0 : index
    %8 = vector.load %arg4[%c0_5, %c0_6] : memref<22x1xf32, #tpu.memory_space<vmem>>, vector<22x1xf32>
    %9 = vector.broadcast %8 : vector<22x1xf32> to vector<22x8xf32>
    %10 = arith.addf %7, %9 : vector<22x8xf32>
    %cst_7 = arith.constant 0.000000e+00 : f32
    %11 = vector.broadcast %cst_7 : f32 to vector<22x8xf32>
    %12 = arith.maximumf %10, %11 : vector<22x8xf32>
    %c0_8 = arith.constant 0 : index
    %c0_9 = arith.constant 0 : index
    %c0_10 = arith.constant 0 : index
    %13 = vector.load %arg5[%c0_8, %c0_9, %c0_10] : memref<3x22x22xbf16, #tpu.memory_space<vmem>>, vector<1x22x22xbf16>
    %14 = vector.shape_cast %13 : vector<1x22x22xbf16> to vector<22x22xbf16>
    %15 = arith.truncf %12 : vector<22x8xf32> to vector<22x8xbf16>
    %cst_11 = arith.constant dense<0.000000e+00> : vector<22x8xf32>
    %16 = tpu.matmul %14, %15, %cst_11 {dimension_numbers = #tpu.dot_dimension_numbers<[0], [0], [1], [1], [0, 1, 1, 1], [], []>} : vector<22x22xbf16>, vector<22x8xbf16>, vector<22x8xf32> -> vector<22x8xf32>
    %c0_12 = arith.constant 0 : index
    %c0_13 = arith.constant 0 : index
    %c0_14 = arith.constant 0 : index
    %17 = vector.load %arg6[%c0_12, %c0_13, %c0_14] : memref<3x22x1xf32, #tpu.memory_space<vmem>>, vector<1x22x1xf32>
    %18 = vector.shape_cast %17 : vector<1x22x1xf32> to vector<22x1xf32>
    %19 = vector.broadcast %18 : vector<22x1xf32> to vector<22x8xf32>
    %20 = arith.addf %16, %19 : vector<22x8xf32>
    %cst_15 = arith.constant 0.000000e+00 : f32
    %21 = vector.broadcast %cst_15 : f32 to vector<22x8xf32>
    %22 = arith.maximumf %20, %21 : vector<22x8xf32>
    %c1 = arith.constant 1 : index
    %c0_16 = arith.constant 0 : index
    %c0_17 = arith.constant 0 : index
    %23 = vector.load %arg5[%c1, %c0_16, %c0_17] : memref<3x22x22xbf16, #tpu.memory_space<vmem>>, vector<1x22x22xbf16>
    %24 = vector.shape_cast %23 : vector<1x22x22xbf16> to vector<22x22xbf16>
    %25 = arith.truncf %22 : vector<22x8xf32> to vector<22x8xbf16>
    %cst_18 = arith.constant dense<0.000000e+00> : vector<22x8xf32>
    %26 = tpu.matmul %24, %25, %cst_18 {dimension_numbers = #tpu.dot_dimension_numbers<[0], [0], [1], [1], [0, 1, 1, 1], [], []>} : vector<22x22xbf16>, vector<22x8xbf16>, vector<22x8xf32> -> vector<22x8xf32>
    %c1_19 = arith.constant 1 : index
    %c0_20 = arith.constant 0 : index
    %c0_21 = arith.constant 0 : index
    %27 = vector.load %arg6[%c1_19, %c0_20, %c0_21] : memref<3x22x1xf32, #tpu.memory_space<vmem>>, vector<1x22x1xf32>
    %28 = vector.shape_cast %27 : vector<1x22x1xf32> to vector<22x1xf32>
    %29 = vector.broadcast %28 : vector<22x1xf32> to vector<22x8xf32>
    %30 = arith.addf %26, %29 : vector<22x8xf32>
    %cst_22 = arith.constant 0.000000e+00 : f32
    %31 = vector.broadcast %cst_22 : f32 to vector<22x8xf32>
    %32 = arith.maximumf %30, %31 : vector<22x8xf32>
    %c2 = arith.constant 2 : index
    %c0_23 = arith.constant 0 : index
    %c0_24 = arith.constant 0 : index
    %33 = vector.load %arg5[%c2, %c0_23, %c0_24] : memref<3x22x22xbf16, #tpu.memory_space<vmem>>, vector<1x22x22xbf16>
    %34 = vector.shape_cast %33 : vector<1x22x22xbf16> to vector<22x22xbf16>
    %35 = arith.truncf %32 : vector<22x8xf32> to vector<22x8xbf16>
    %cst_25 = arith.constant dense<0.000000e+00> : vector<22x8xf32>
    %36 = tpu.matmul %34, %35, %cst_25 {dimension_numbers = #tpu.dot_dimension_numbers<[0], [0], [1], [1], [0, 1, 1, 1], [], []>} : vector<22x22xbf16>, vector<22x8xbf16>, vector<22x8xf32> -> vector<22x8xf32>
    %c2_26 = arith.constant 2 : index
    %c0_27 = arith.constant 0 : index
    %c0_28 = arith.constant 0 : index
    %37 = vector.load %arg6[%c2_26, %c0_27, %c0_28] : memref<3x22x1xf32, #tpu.memory_space<vmem>>, vector<1x22x1xf32>
    %38 = vector.shape_cast %37 : vector<1x22x1xf32> to vector<22x1xf32>
    %39 = vector.broadcast %38 : vector<22x1xf32> to vector<22x8xf32>
    %40 = arith.addf %36, %39 : vector<22x8xf32>
    %cst_29 = arith.constant 0.000000e+00 : f32
    %41 = vector.broadcast %cst_29 : f32 to vector<22x8xf32>
    %42 = arith.maximumf %40, %41 : vector<22x8xf32>
    %c0_30 = arith.constant 0 : index
    %c0_31 = arith.constant 0 : index
    %43 = vector.load %arg14[%c0_30, %c0_31] : memref<22x1xf32, #tpu.memory_space<vmem>>, vector<22x1xf32>
    %cst_32 = arith.constant dense<0.000000e+00> : vector<22xf32>
    %44 = vector.multi_reduction <add>, %42, %cst_32 [1] : vector<22x8xf32> to vector<22xf32>
    %45 = vector.shape_cast %44 : vector<22xf32> to vector<22x1xf32>
    %46 = arith.addf %43, %45 : vector<22x1xf32>
    %c0_33 = arith.constant 0 : index
    %c0_34 = arith.constant 0 : index
    %47 = vector.load %arg14[%c0_33, %c0_34] : memref<22x1xf32, #tpu.memory_space<vmem>>, vector<22x1xf32>
    tpu.vector_store %arg14[%c0_33, %c0_34], %46 {strides = array<i32>} : memref<22x1xf32, #tpu.memory_space<vmem>>, vector<22x1xf32>,
    %c0_i32_35 = arith.constant 0 : i32
    %48 = arith.cmpi eq, %arg1, %c0_i32_35 : i32
    %49 = arith.extui %48 : i1 to i32
    %c0_i32_36 = arith.constant 0 : i32
    %50 = arith.cmpi ne, %49, %c0_i32_36 : i32
    scf.if %50 {
      %c0_37 = arith.constant 0 : index
      %c0_38 = arith.constant 0 : index
      %51 = vector.load %arg14[%c0_37, %c0_38] : memref<22x1xf32, #tpu.memory_space<vmem>>, vector<22x1xf32>
      %cst_39 = arith.constant 1.250000e-01 : f32
      %52 = vector.broadcast %cst_39 : f32 to vector<22x1xf32>
      %53 = arith.mulf %51, %52 : vector<22x1xf32>
      %c0_40 = arith.constant 0 : index
      %c0_41 = arith.constant 0 : index
      %54 = vector.load %arg7[%c0_40, %c0_41] : memref<22x60xf32, #tpu.memory_space<vmem>>, vector<22x60xf32>
      %55 = vector.broadcast %53 : vector<22x1xf32> to vector<22x60xf32>
      %56 = arith.mulf %54, %55 : vector<22x60xf32>
      %cst_42 = arith.constant dense<0.000000e+00> : vector<60xf32>
      %57 = vector.multi_reduction <add>, %56, %cst_42 [0] : vector<22x60xf32> to vector<60xf32>
      %58 = vector.shape_cast %57 : vector<60xf32> to vector<1x60xf32>
      %c0_43 = arith.constant 0 : index
      %c0_44 = arith.constant 0 : index
      %59 = vector.load %arg8[%c0_43, %c0_44] : memref<1x60xf32, #tpu.memory_space<vmem>>, vector<1x60xf32>
      %60 = arith.addf %58, %59 : vector<1x60xf32>
      %c0_45 = arith.constant 0 : index
      %c0_46 = arith.constant 0 : index
      %61 = vector.load %arg9[%c0_45, %c0_46] : memref<60x30xf32, #tpu.memory_space<vmem>>, vector<60x30xf32>
      %cst_47 = arith.constant dense<0.000000e+00> : vector<1x30xf32>
      %62 = tpu.matmul %60, %61, %cst_47 {dimension_numbers = #tpu.dot_dimension_numbers<[1], [0], [0], [1], [0, 0, 1, 1], [], []>} : vector<1x60xf32>, vector<60x30xf32>, vector<1x30xf32> -> vector<1x30xf32>
      %c0_48 = arith.constant 0 : index
      %c0_49 = arith.constant 0 : index
      %63 = vector.load %arg10[%c0_48, %c0_49] : memref<1x30xf32, #tpu.memory_space<vmem>>, vector<1x30xf32>
      %64 = arith.addf %62, %63 : vector<1x30xf32>
      %cst_50 = arith.constant 0.000000e+00 : f32
      %65 = vector.broadcast %cst_50 : f32 to vector<1x30xf32>
      %66 = arith.maximumf %64, %65 : vector<1x30xf32>
      %c0_51 = arith.constant 0 : index
      %c0_52 = arith.constant 0 : index
      %67 = vector.load %arg11[%c0_51, %c0_52] : memref<1x30xf32, #tpu.memory_space<vmem>>, vector<1x30xf32>
      %68 = arith.mulf %66, %67 : vector<1x30xf32>
      %cst_53 = arith.constant dense<0.000000e+00> : vector<1xf32>
      %69 = vector.multi_reduction <add>, %68, %cst_53 [1] : vector<1x30xf32> to vector<1xf32>
      %70 = vector.shape_cast %69 : vector<1xf32> to vector<1x1xf32>
      %c0_54 = arith.constant 0 : index
      %c0_55 = arith.constant 0 : index
      %71 = vector.load %arg12[%c0_54, %c0_55] : memref<1x1xf32, #tpu.memory_space<vmem>>, vector<1x1xf32>
      %72 = arith.addf %70, %71 : vector<1x1xf32>
      %73 = arith.negf %72 : vector<1x1xf32>
      %74 = math.exp %73 : vector<1x1xf32>
      %cst_56 = arith.constant 1.000000e+00 : f32
      %75 = vector.broadcast %cst_56 : f32 to vector<1x1xf32>
      %76 = arith.addf %75, %74 : vector<1x1xf32>
      %77 = arith.divf %75, %76 : vector<1x1xf32>
      %c0_57 = arith.constant 0 : index
      %c0_58 = arith.constant 0 : index
      %c0_59 = arith.constant 0 : index
      %78 = vector.load %arg13[%c0_57, %c0_58, %c0_59] : memref<1x1x1xf32, #tpu.memory_space<vmem>>, vector<1x1x1xf32>
      %79 = vector.shape_cast %78 : vector<1x1x1xf32> to vector<1x1xf32>
      %80 = vector.shape_cast %77 : vector<1x1xf32> to vector<1x1x1xf32>
      tpu.vector_store %arg13[%c0_57, %c0_58, %c0_59], %80 {strides = array<i32>} : memref<1x1x1xf32, #tpu.memory_space<vmem>>, vector<1x1x1xf32>,
    } else {
    }
    return
  }
  func.func @transform_0(%arg0: i32, %arg1: i32) -> (i32, i32, i32) {
    %c0_i32 = arith.constant 0 : i32
    %c0_i32_0 = arith.constant 0 : i32
    return %arg0, %arg1, %c0_i32 : i32, i32, i32
  }
  func.func @transform_1(%arg0: i32, %arg1: i32) -> (i32, i32) {
    %c0_i32 = arith.constant 0 : i32
    %c0_i32_0 = arith.constant 0 : i32
    %c0_i32_1 = arith.constant 0 : i32
    return %c0_i32, %c0_i32_0 : i32, i32
  }
  func.func @transform_2(%arg0: i32, %arg1: i32) -> (i32, i32) {
    %c0_i32 = arith.constant 0 : i32
    %c0_i32_0 = arith.constant 0 : i32
    %c0_i32_1 = arith.constant 0 : i32
    return %c0_i32, %c0_i32_0 : i32, i32
  }
  func.func @transform_3(%arg0: i32, %arg1: i32) -> (i32, i32, i32) {
    %c0_i32 = arith.constant 0 : i32
    %c0_i32_0 = arith.constant 0 : i32
    %c0_i32_1 = arith.constant 0 : i32
    %c0_i32_2 = arith.constant 0 : i32
    return %c0_i32, %c0_i32_0, %c0_i32_1 : i32, i32, i32
  }
  func.func @transform_4(%arg0: i32, %arg1: i32) -> (i32, i32, i32) {
    %c0_i32 = arith.constant 0 : i32
    %c0_i32_0 = arith.constant 0 : i32
    %c0_i32_1 = arith.constant 0 : i32
    %c0_i32_2 = arith.constant 0 : i32
    return %c0_i32, %c0_i32_0, %c0_i32_1 : i32, i32, i32
  }
  func.func @transform_5(%arg0: i32, %arg1: i32) -> (i32, i32) {
    %c0_i32 = arith.constant 0 : i32
    %c0_i32_0 = arith.constant 0 : i32
    %c0_i32_1 = arith.constant 0 : i32
    return %c0_i32, %c0_i32_0 : i32, i32
  }
  func.func @transform_6(%arg0: i32, %arg1: i32) -> (i32, i32) {
    %c0_i32 = arith.constant 0 : i32
    %c0_i32_0 = arith.constant 0 : i32
    %c0_i32_1 = arith.constant 0 : i32
    return %c0_i32, %c0_i32_0 : i32, i32
  }
  func.func @transform_7(%arg0: i32, %arg1: i32) -> (i32, i32) {
    %c0_i32 = arith.constant 0 : i32
    %c0_i32_0 = arith.constant 0 : i32
    %c0_i32_1 = arith.constant 0 : i32
    return %c0_i32, %c0_i32_0 : i32, i32
  }
  func.func @transform_8(%arg0: i32, %arg1: i32) -> (i32, i32) {
    %c0_i32 = arith.constant 0 : i32
    %c0_i32_0 = arith.constant 0 : i32
    %c0_i32_1 = arith.constant 0 : i32
    return %c0_i32, %c0_i32_0 : i32, i32
  }
  func.func @transform_9(%arg0: i32, %arg1: i32) -> (i32, i32) {
    %c0_i32 = arith.constant 0 : i32
    %c0_i32_0 = arith.constant 0 : i32
    %c0_i32_1 = arith.constant 0 : i32
    return %c0_i32, %c0_i32_0 : i32, i32
  }
  func.func @transform_10(%arg0: i32, %arg1: i32) -> (i32, i32) {
    %c0_i32 = arith.constant 0 : i32
    %c0_i32_0 = arith.constant 0 : i32
    %c0_i32_1 = arith.constant 0 : i32
    return %c0_i32, %c0_i32_0 : i32, i32
  }
  func.func @transform_11(%arg0: i32, %arg1: i32) -> (i32, i32, i32) {
    %c0_i32 = arith.constant 0 : i32
    %c0_i32_0 = arith.constant 0 : i32
    %c0_i32_1 = arith.constant 0 : i32
    return %arg0, %c0_i32, %c0_i32_0 : i32, i32, i32
  }
}

</mosaic_0001>

<llo_original>
// kernel: tpu_custom_call.1
$region0: #{tpu_custom_call.1}
  #allocation0 [shape = 'u32[]', space=smem, size = 0x4, offset = 0x4, fixed_abs, tag = 'smem constant byte address 0x4 - core index']
  #allocation1 [shape = 'u32[72,128]{1,0:T(1,128)}', space=vmem, size = 0x9000, scoped, tag = 'internal scratch']
  #allocation2 [shape = 'f32[22,1]{1,0:T(8,128)}', space=vmem, size = 0x3000, scoped, tag = 'scratch operand']
  #allocation3 [shape = 'f32[1,1]{1,0:T(1,128)S(1)}', space=vmem, size = 0x200, scoped, tag = 'scoped memory for tpu_custom_call.1']
  %s0 = inlined_call_operand.vmem [shape: f32[2,8,200], index: 0, kind: input, shape index: {}]
  %s1 = inlined_call_operand.vmem [shape: bf16[200,22], index: 1, kind: input, shape index: {}]
  %s2 = inlined_call_operand.vmem [shape: f32[22,1], index: 2, kind: input, shape index: {}]
  %s3 = inlined_call_operand.vmem [shape: bf16[3,22,22], index: 3, kind: input, shape index: {}]
  %s4 = inlined_call_operand.vmem [shape: f32[3,22,1], index: 4, kind: input, shape index: {}]
  %s5 = inlined_call_operand.vmem [shape: f32[22,60], index: 5, kind: input, shape index: {}]
  %s6 = inlined_call_operand.vmem [shape: f32[1,60], index: 6, kind: input, shape index: {}]
  %s7 = inlined_call_operand.vmem [shape: f32[60,30], index: 7, kind: input, shape index: {}]
  %s8 = inlined_call_operand.vmem [shape: f32[1,30], index: 8, kind: input, shape index: {}]
  %s9 = inlined_call_operand.vmem [shape: f32[1,30], index: 9, kind: input, shape index: {}]
  %s10 = inlined_call_operand.<no memory space> [shape: f32[1,1], index: 10, kind: input, shape index: {}]
  %s11 = inlined_call_operand.vmem [shape: f32[2,1,1], index: 11, kind: output, shape index: {}]
  %s12 = sld [smem:[#allocation0]]
  $region85: #{tpu_custom_call.1} parent=0
    _
  %s14 = ssub.s32 1, %s12
  %s15 = scalar_select 0, %s14, %s12
  %v16 = vstv %s10
  %17 = vst [vmem:[#allocation3] sm:$0x1] %v16
  loop: start=0, step=1, limit=4
  $region2: #{tpu_custom_call.1} parent=0 // loop_pre_header
    _
  $region3: #{tpu_custom_call.1} parent=0 // loop_header
    %s19 = sphi 0, %s23
    %p20 = scmp.ge.s32.totalorder %s19, 4
    %s26 = sphi 0, %s38
    %s27 = sphi 0, %s34
    %s28 = sphi 0, %s26
    %s29 = sphi 0, %s27
    %s30 = sphi 0, %s28
    %s31 = sphi 0, %s29
    %s43 = sphi 0, %s45
    %s46 = sphi 0, %s43
    %s47 = sphi 0, %s46
    %s63 = sphi 0, %s47
    %s67 = sphi 0, %s67
    %s69 = sphi 0, %s67
    %s70 = sphi 0, %s69
    %s84 = sphi 0, %s70
    %s88 = sphi 0, %s88
    %s90 = sphi 0, %s88
    %s91 = sphi 0, %s90
    %s105 = sphi 0, %s91
    %s109 = sphi 0, %s109
    %s111 = sphi 0, %s109
    %s112 = sphi 0, %s111
    %s126 = sphi 0, %s112
    %s130 = sphi 0, %s130
    %s132 = sphi 0, %s130
    %s133 = sphi 0, %s132
    %s147 = sphi 0, %s133
    %s151 = sphi 0, %s151
    %s153 = sphi 0, %s151
    %s154 = sphi 0, %s153
    %s168 = sphi 0, %s154
    %s172 = sphi 0, %s172
    %s174 = sphi 0, %s172
    %s175 = sphi 0, %s174
    %s189 = sphi 0, %s175
    %s193 = sphi 0, %s193
    %s195 = sphi 0, %s193
    %s196 = sphi 0, %s195
    %s210 = sphi 0, %s196
    %s214 = sphi 0, %s214
    %s216 = sphi 0, %s214
    %s217 = sphi 0, %s216
    %s231 = sphi 0, %s217
    %s235 = sphi 0, %s235
    %s237 = sphi 0, %s235
    %s238 = sphi 0, %s237
    %s252 = sphi 0, %s238
    %s256 = sphi 0, %s256
    %s258 = sphi 0, %s256
    %s259 = sphi 0, %s258
    %s273 = sphi 0, %s259
    %s279 = sphi 0, %s281
    %s282 = sphi 0, %s279
    %s283 = sphi 0, %s282
    %s299 = sphi 0, %s283
  $region4: #{tpu_custom_call.1} parent=0 // loop_header_branch
    %22 = sbr.rel (%p20) target = $region8
  $region5: #{tpu_custom_call.1} parent=0 // loop_body
    %s24 = ssub.s32 %s19, 1
    %s25 = ssub.s32 %s19, 2
    %s32 = sadd.s32 1, %s27
    %p33 = scmp.ge.s32.totalorder %s32, 1
    %s34 = scalar_select %p33, 0, %s32
    %s35 = sadd.s32 1, %s26
    %s36 = scalar_select %p33, %s35, %s26
    %p37 = scmp.ge.s32.totalorder %s36, 2
    %s38 = scalar_select %p37, 0, %s36
    %s39 = ssub.s32 %s26, %s38
    %s40 = ssub.s32 %s27, %s34
    %s41 = sor.u32 %s39, %s40
    %p42 = scmp.eq.s32.totalorder %s41, 0
    %s44 = sadd.s32 %s43, 1
    %s45 = scalar_select %p42, %s43, %s44
    %p48 = pneg %p42
    %p49 = scmp.eq.s32.totalorder %s19, 1
    %p50 = por %p48, %p49
    %p51 = scmp.ne.s32.totalorder %s43, %s46
    %p52 = scmp.eq.s32.totalorder %s19, 0
    %p53 = por %p51, %p52
    %p54 = scmp.ne.s32.totalorder %s43, %s46
    %p55 = scmp.eq.s32.totalorder %s24, 1
    %p56 = por %p54, %p55
    %p57 = scmp.ne.s32.totalorder %s46, %s47
    %p58 = scmp.eq.s32.totalorder %s24, 0
    %p59 = por %p57, %p58
    %p60 = scmp.ne.s32.totalorder %s46, %s47
    %p61 = scmp.eq.s32.totalorder %s25, 1
    %p62 = por %p60, %p61
    %p64 = scmp.ne.s32.totalorder %s47, %s63
    %p65 = scmp.eq.s32.totalorder %s25, 0
    %p66 = por %p64, %p65
    %s68 = sadd.s32 %s67, 1
    %p71 = scmp.eq.s32.totalorder %s19, 1
    %p72 = scmp.ne.s32.totalorder %s67, %s69
    %p73 = scmp.eq.s32.totalorder %s19, 0
    %p74 = por %p72, %p73
    %p75 = scmp.ne.s32.totalorder %s67, %s69
    %p76 = scmp.eq.s32.totalorder %s24, 1
    %p77 = por %p75, %p76
    %p78 = scmp.ne.s32.totalorder %s69, %s70
    %p79 = scmp.eq.s32.totalorder %s24, 0
    %p80 = por %p78, %p79
    %p81 = scmp.ne.s32.totalorder %s69, %s70
    %p82 = scmp.eq.s32.totalorder %s25, 1
    %p83 = por %p81, %p82
    %p85 = scmp.ne.s32.totalorder %s70, %s84
    %p86 = scmp.eq.s32.totalorder %s25, 0
    %p87 = por %p85, %p86
    %s89 = sadd.s32 %s88, 1
    %p92 = scmp.eq.s32.totalorder %s19, 1
    %p93 = scmp.ne.s32.totalorder %s88, %s90
    %p94 = scmp.eq.s32.totalorder %s19, 0
    %p95 = por %p93, %p94
    %p96 = scmp.ne.s32.totalorder %s88, %s90
    %p97 = scmp.eq.s32.totalorder %s24, 1
    %p98 = por %p96, %p97
    %p99 = scmp.ne.s32.totalorder %s90, %s91
    %p100 = scmp.eq.s32.totalorder %s24, 0
    %p101 = por %p99, %p100
    %p102 = scmp.ne.s32.totalorder %s90, %s91
    %p103 = scmp.eq.s32.totalorder %s25, 1
    %p104 = por %p102, %p103
    %p106 = scmp.ne.s32.totalorder %s91, %s105
    %p107 = scmp.eq.s32.totalorder %s25, 0
    %p108 = por %p106, %p107
    %s110 = sadd.s32 %s109, 1
    %p113 = scmp.eq.s32.totalorder %s19, 1
    %p114 = scmp.ne.s32.totalorder %s109, %s111
    %p115 = scmp.eq.s32.totalorder %s19, 0
    %p116 = por %p114, %p115
    %p117 = scmp.ne.s32.totalorder %s109, %s111
    %p118 = scmp.eq.s32.totalorder %s24, 1
    %p119 = por %p117, %p118
    %p120 = scmp.ne.s32.totalorder %s111, %s112
    %p121 = scmp.eq.s32.totalorder %s24, 0
    %p122 = por %p120, %p121
    %p123 = scmp.ne.s32.totalorder %s111, %s112
    %p124 = scmp.eq.s32.totalorder %s25, 1
    %p125 = por %p123, %p124
    %p127 = scmp.ne.s32.totalorder %s112, %s126
    %p128 = scmp.eq.s32.totalorder %s25, 0
    %p129 = por %p127, %p128
    %s131 = sadd.s32 %s130, 1
    %p134 = scmp.eq.s32.totalorder %s19, 1
    %p135 = scmp.ne.s32.totalorder %s130, %s132
    %p136 = scmp.eq.s32.totalorder %s19, 0
    %p137 = por %p135, %p136
    %p138 = scmp.ne.s32.totalorder %s130, %s132
    %p139 = scmp.eq.s32.totalorder %s24, 1
    %p140 = por %p138, %p139
    %p141 = scmp.ne.s32.totalorder %s132, %s133
    %p142 = scmp.eq.s32.totalorder %s24, 0
    %p143 = por %p141, %p142
    %p144 = scmp.ne.s32.totalorder %s132, %s133
    %p145 = scmp.eq.s32.totalorder %s25, 1
    %p146 = por %p144, %p145
    %p148 = scmp.ne.s32.totalorder %s133, %s147
    %p149 = scmp.eq.s32.totalorder %s25, 0
    %p150 = por %p148, %p149
    %s152 = sadd.s32 %s151, 1
    %p155 = scmp.eq.s32.totalorder %s19, 1
    %p156 = scmp.ne.s32.totalorder %s151, %s153
    %p157 = scmp.eq.s32.totalorder %s19, 0
    %p158 = por %p156, %p157
    %p159 = scmp.ne.s32.totalorder %s151, %s153
    %p160 = scmp.eq.s32.totalorder %s24, 1
    %p161 = por %p159, %p160
    %p162 = scmp.ne.s32.totalorder %s153, %s154
    %p163 = scmp.eq.s32.totalorder %s24, 0
    %p164 = por %p162, %p163
    %p165 = scmp.ne.s32.totalorder %s153, %s154
    %p166 = scmp.eq.s32.totalorder %s25, 1
    %p167 = por %p165, %p166
    %p169 = scmp.ne.s32.totalorder %s154, %s168
    %p170 = scmp.eq.s32.totalorder %s25, 0
    %p171 = por %p169, %p170
    %s173 = sadd.s32 %s172, 1
    %p176 = scmp.eq.s32.totalorder %s19, 1
    %p177 = scmp.ne.s32.totalorder %s172, %s174
    %p178 = scmp.eq.s32.totalorder %s19, 0
    %p179 = por %p177, %p178
    %p180 = scmp.ne.s32.totalorder %s172, %s174
    %p181 = scmp.eq.s32.totalorder %s24, 1
    %p182 = por %p180, %p181
    %p183 = scmp.ne.s32.totalorder %s174, %s175
    %p184 = scmp.eq.s32.totalorder %s24, 0
    %p185 = por %p183, %p184
    %p186 = scmp.ne.s32.totalorder %s174, %s175
    %p187 = scmp.eq.s32.totalorder %s25, 1
    %p188 = por %p186, %p187
    %p190 = scmp.ne.s32.totalorder %s175, %s189
    %p191 = scmp.eq.s32.totalorder %s25, 0
    %p192 = por %p190, %p191
    %s194 = sadd.s32 %s193, 1
    %p197 = scmp.eq.s32.totalorder %s19, 1
    %p198 = scmp.ne.s32.totalorder %s193, %s195
    %p199 = scmp.eq.s32.totalorder %s19, 0
    %p200 = por %p198, %p199
    %p201 = scmp.ne.s32.totalorder %s193, %s195
    %p202 = scmp.eq.s32.totalorder %s24, 1
    %p203 = por %p201, %p202
    %p204 = scmp.ne.s32.totalorder %s195, %s196
    %p205 = scmp.eq.s32.totalorder %s24, 0
    %p206 = por %p204, %p205
    %p207 = scmp.ne.s32.totalorder %s195, %s196
    %p208 = scmp.eq.s32.totalorder %s25, 1
    %p209 = por %p207, %p208
    %p211 = scmp.ne.s32.totalorder %s196, %s210
    %p212 = scmp.eq.s32.totalorder %s25, 0
    %p213 = por %p211, %p212
    %s215 = sadd.s32 %s214, 1
    %p218 = scmp.eq.s32.totalorder %s19, 1
    %p219 = scmp.ne.s32.totalorder %s214, %s216
    %p220 = scmp.eq.s32.totalorder %s19, 0
    %p221 = por %p219, %p220
    %p222 = scmp.ne.s32.totalorder %s214, %s216
    %p223 = scmp.eq.s32.totalorder %s24, 1
    %p224 = por %p222, %p223
    %p225 = scmp.ne.s32.totalorder %s216, %s217
    %p226 = scmp.eq.s32.totalorder %s24, 0
    %p227 = por %p225, %p226
    %p228 = scmp.ne.s32.totalorder %s216, %s217
    %p229 = scmp.eq.s32.totalorder %s25, 1
    %p230 = por %p228, %p229
    %p232 = scmp.ne.s32.totalorder %s217, %s231
    %p233 = scmp.eq.s32.totalorder %s25, 0
    %p234 = por %p232, %p233
    %s236 = sadd.s32 %s235, 1
    %p239 = scmp.eq.s32.totalorder %s19, 1
    %p240 = scmp.ne.s32.totalorder %s235, %s237
    %p241 = scmp.eq.s32.totalorder %s19, 0
    %p242 = por %p240, %p241
    %p243 = scmp.ne.s32.totalorder %s235, %s237
    %p244 = scmp.eq.s32.totalorder %s24, 1
    %p245 = por %p243, %p244
    %p246 = scmp.ne.s32.totalorder %s237, %s238
    %p247 = scmp.eq.s32.totalorder %s24, 0
    %p248 = por %p246, %p247
    %p249 = scmp.ne.s32.totalorder %s237, %s238
    %p250 = scmp.eq.s32.totalorder %s25, 1
    %p251 = por %p249, %p250
    %p253 = scmp.ne.s32.totalorder %s238, %s252
    %p254 = scmp.eq.s32.totalorder %s25, 0
    %p255 = por %p253, %p254
    %s257 = sadd.s32 %s256, 1
    %p260 = scmp.eq.s32.totalorder %s19, 1
    %p261 = scmp.ne.s32.totalorder %s256, %s258
    %p262 = scmp.eq.s32.totalorder %s19, 0
    %p263 = por %p261, %p262
    %p264 = scmp.ne.s32.totalorder %s256, %s258
    %p265 = scmp.eq.s32.totalorder %s24, 1
    %p266 = por %p264, %p265
    %p267 = scmp.ne.s32.totalorder %s258, %s259
    %p268 = scmp.eq.s32.totalorder %s24, 0
    %p269 = por %p267, %p268
    %p270 = scmp.ne.s32.totalorder %s258, %s259
    %p271 = scmp.eq.s32.totalorder %s25, 1
    %p272 = por %p270, %p271
    %p274 = scmp.ne.s32.totalorder %s259, %s273
    %p275 = scmp.eq.s32.totalorder %s25, 0
    %p276 = por %p274, %p275
    %s277 = ssub.s32 %s26, %s38
    %p278 = scmp.eq.s32.totalorder %s277, 0
    %s280 = sadd.s32 %s279, 1
    %s281 = scalar_select %p278, %s279, %s280
    %p284 = pneg %p278
    %p285 = scmp.eq.s32.totalorder %s19, 1
    %p286 = por %p284, %p285
    %p287 = scmp.ne.s32.totalorder %s279, %s282
    %p288 = scmp.eq.s32.totalorder %s19, 0
    %p289 = por %p287, %p288
    %p290 = scmp.ne.s32.totalorder %s279, %s282
    %p291 = scmp.eq.s32.totalorder %s24, 1
    %p292 = por %p290, %p291
    %p293 = scmp.ne.s32.totalorder %s282, %s283
    %p294 = scmp.eq.s32.totalorder %s24, 0
    %p295 = por %p293, %p294
    %p296 = scmp.ne.s32.totalorder %s282, %s283
    %p297 = scmp.eq.s32.totalorder %s25, 1
    %p298 = por %p296, %p297
    %p300 = scmp.ne.s32.totalorder %s283, %s299
    %p301 = scmp.eq.s32.totalorder %s25, 0
    %p302 = por %p300, %p301
    %p303 = scmp.le.s32.totalorder 1, %s19
    %p304 = scmp.lt.s32.totalorder %s19, 3
    %p305 = pnand %p303, %p304
    %p306 = pneg %p305
    // Predicated region
    $region9: #{tpu_custom_call.1} parent=5 // pred_check
      _
    $region10: #{tpu_custom_call.1} parent=5 // pred_check_branch
      %308 = sbr.rel (%p305) target = $region12
    $region11: #{tpu_custom_call.1} parent=5 // pred_region
      %s309 = ssub.s32 %s19, 1
      // Predicated region
      $region13: #{tpu_custom_call.1} parent=11 // pred_check
        %p310 = pneg %p80
      $region14: #{tpu_custom_call.1} parent=11 // pred_check_branch
        %312 = sbr.rel (%p310) target = $region16
      $region15: #{tpu_custom_call.1} parent=11 // pred_region
        _
      $region16: #{tpu_custom_call.1} parent=11 // pred_fallthru
        _
      // Predicated region
      $region17: #{tpu_custom_call.1} parent=11 // pred_check
        %p313 = pneg %p101
      $region18: #{tpu_custom_call.1} parent=11 // pred_check_branch
        %315 = sbr.rel (%p313) target = $region20
      $region19: #{tpu_custom_call.1} parent=11 // pred_region
        _
      $region20: #{tpu_custom_call.1} parent=11 // pred_fallthru
        _
      // Predicated region
      $region21: #{tpu_custom_call.1} parent=11 // pred_check
        %p316 = pneg %p122
      $region22: #{tpu_custom_call.1} parent=11 // pred_check_branch
        %318 = sbr.rel (%p316) target = $region24
      $region23: #{tpu_custom_call.1} parent=11 // pred_region
        _
      $region24: #{tpu_custom_call.1} parent=11 // pred_fallthru
        _
      // Predicated region
      $region25: #{tpu_custom_call.1} parent=11 // pred_check
        %p319 = pneg %p143
      $region26: #{tpu_custom_call.1} parent=11 // pred_check_branch
        %321 = sbr.rel (%p319) target = $region28
      $region27: #{tpu_custom_call.1} parent=11 // pred_region
        _
      $region28: #{tpu_custom_call.1} parent=11 // pred_fallthru
        _
      // Predicated region
      $region29: #{tpu_custom_call.1} parent=11 // pred_check
        %p322 = pneg %p164
      $region30: #{tpu_custom_call.1} parent=11 // pred_check_branch
        %324 = sbr.rel (%p322) target = $region32
      $region31: #{tpu_custom_call.1} parent=11 // pred_region
        _
      $region32: #{tpu_custom_call.1} parent=11 // pred_fallthru
        _
      // Predicated region
      $region33: #{tpu_custom_call.1} parent=11 // pred_check
        %p325 = pneg %p185
      $region34: #{tpu_custom_call.1} parent=11 // pred_check_branch
        %327 = sbr.rel (%p325) target = $region36
      $region35: #{tpu_custom_call.1} parent=11 // pred_region
        _
      $region36: #{tpu_custom_call.1} parent=11 // pred_fallthru
        _
      // Predicated region
      $region37: #{tpu_custom_call.1} parent=11 // pred_check
        %p328 = pneg %p206
      $region38: #{tpu_custom_call.1} parent=11 // pred_check_branch
        %330 = sbr.rel (%p328) target = $region40
      $region39: #{tpu_custom_call.1} parent=11 // pred_region
        _
      $region40: #{tpu_custom_call.1} parent=11 // pred_fallthru
        _
      // Predicated region
      $region41: #{tpu_custom_call.1} parent=11 // pred_check
        %p331 = pneg %p227
      $region42: #{tpu_custom_call.1} parent=11 // pred_check_branch
        %333 = sbr.rel (%p331) target = $region44
      $region43: #{tpu_custom_call.1} parent=11 // pred_region
        _
      $region44: #{tpu_custom_call.1} parent=11 // pred_fallthru
        _
      // Predicated region
      $region45: #{tpu_custom_call.1} parent=11 // pred_check
        %p334 = pneg %p248
      $region46: #{tpu_custom_call.1} parent=11 // pred_check_branch
        %336 = sbr.rel (%p334) target = $region48
      $region47: #{tpu_custom_call.1} parent=11 // pred_region
        _
      $region48: #{tpu_custom_call.1} parent=11 // pred_fallthru
        _
      // Predicated region
      $region49: #{tpu_custom_call.1} parent=11 // pred_check
        %p337 = pneg %p269
      $region50: #{tpu_custom_call.1} parent=11 // pred_check_branch
        %339 = sbr.rel (%p337) target = $region52
      $region51: #{tpu_custom_call.1} parent=11 // pred_region
        _
      $region52: #{tpu_custom_call.1} parent=11 // pred_fallthru
        _
    $region12: #{tpu_custom_call.1} parent=5 // pred_fallthru
      _
    %p340 = scmp.lt.s32.totalorder %s19, 2
    // Predicated region
    $region53: #{tpu_custom_call.1} parent=5 // pred_check
      %p341 = pneg %p340
    $region54: #{tpu_custom_call.1} parent=5 // pred_check_branch
      %343 = sbr.rel (%p341) target = $region56
    $region55: #{tpu_custom_call.1} parent=5 // pred_region
      // Predicated region
      $region57: #{tpu_custom_call.1} parent=55 // pred_check
        %p344 = pneg %p53
      $region58: #{tpu_custom_call.1} parent=55 // pred_check_branch
        %346 = sbr.rel (%p344) target = $region60
      $region59: #{tpu_custom_call.1} parent=55 // pred_region
        %p347 = scmp.lt.s32.totalorder %s26, 1
        %s348 = scalar_select %p347, %s26, 1
        %p349 = scmp.lt.s32.totalorder %s27, 0
        %s350 = scalar_select %p349, %s27, 0
        %s351 = smul.addr %s350, 2
        %s352 = smul.addr %s348, 2
        %s353 = sadd.s32 %s351, %s352
        %s354 = smul.addr %s353, 8
        %s355 = scalar_lea.vmem %s0, %s354
      $region60: #{tpu_custom_call.1} parent=55 // pred_fallthru
        _
    $region56: #{tpu_custom_call.1} parent=5 // pred_fallthru
      _
    %p356 = scmp.le.s32.totalorder 1, %s19
    %p357 = scmp.lt.s32.totalorder %s19, 3
    %p358 = pnand %p356, %p357
    %p359 = pneg %p358
    // Predicated region
    $region61: #{tpu_custom_call.1} parent=5 // pred_check
      _
    $region62: #{tpu_custom_call.1} parent=5 // pred_check_branch
      %361 = sbr.rel (%p358) target = $region64
    $region63: #{tpu_custom_call.1} parent=5 // pred_region
      %s362 = ssub.s32 %s19, 1
      %p363 = scmp.lt.s32.totalorder %s28, 1
      %s364 = scalar_select %p363, %s28, 1
      %p365 = scmp.lt.s32.totalorder %s29, 0
      %s366 = scalar_select %p365, %s29, 0
      %s367 = smul.addr %s366, 2
      %s368 = smul.addr %s364, 2
      %s369 = sadd.s32 %s367, %s368
      %s370 = smul.addr %s369, 8
      %s371 = scalar_lea.vmem %s0, %s370
      %p372 = pneg %p59
      %p373 = pneg %p56
      %p374 = pneg %p80
      %p375 = pneg %p77
      %p376 = pneg %p101
      %p377 = pneg %p98
      %p378 = pneg %p122
      %p379 = pneg %p119
      %p380 = pneg %p143
      %p381 = pneg %p140
      %p382 = pneg %p164
      %p383 = pneg %p161
      %p384 = pneg %p185
      %p385 = pneg %p182
      %p386 = pneg %p206
      %p387 = pneg %p203
      %p388 = pneg %p227
      %p389 = pneg %p224
      %p390 = pneg %p248
      %p391 = pneg %p245
      %p392 = pneg %p269
      %p393 = pneg %p266
      %p394 = pneg %p295
      %p395 = pneg %p292
      %p396 = scmp.lt.s32.totalorder %s28, 1
      %s397 = scalar_select %p396, %s28, 1
      %s398 = scalar_lea.vmem %s11, %s397
      %p399 = scmp.lt.s32.totalorder %s28, 1
      %s400 = scalar_select %p399, %s28, 1
      %p401 = scmp.lt.s32.totalorder %s29, 0
      %s402 = scalar_select %p401, %s29, 0
      %s403 = smul.addr %s402, 2
      %s404 = smul.addr %s400, 2
      %s405 = sadd.s32 %s403, %s404
      %s406 = smul.addr %s405, 8
      %s407 = scalar_lea.vmem %s0, %s406
      %p408 = scmp.lt.s32.totalorder %s28, 1
      %s409 = scalar_select %p408, %s28, 1
      %s410 = scalar_lea.vmem %s11, %s409
      %p412 = scmp.eq.s32.totalorder %s29, 0
      // Predicated region
      $region65: #{tpu_custom_call.1} parent=63 // pred_check
        %p413 = pneg %p412
      $region66: #{tpu_custom_call.1} parent=63 // pred_check_branch
        %415 = sbr.rel (%p413) target = $region68
      $region67: #{tpu_custom_call.1} parent=63 // pred_region
        %vm416 = vcmask 7168
        %417 = vst.msk [vmem:[#allocation2] sm:$0xff] %vm416, 0.0
        %418 = vst.msk [vmem:[#allocation2 + $0x8] sm:$0xff] %vm416, 0.0
        %vm419 = vcmask 5120
        %420 = vst.msk [vmem:[#allocation2 + $0x10] sm:$0x3f] %vm419, 0.0
      $region68: #{tpu_custom_call.1} parent=63 // pred_fallthru
        _
      %v421 = vld [vmem:[%s407] sm:$0xff]
      %v422 = vld [vmem:[%s407 + $0x8] sm:$0xff]
      %v423 = vpack.c.bf16 %v421, %v421
      %v424 = vpack.c.bf16 %v422, %v422
      %v425 = vld [vmem:[%s1] sm:$0xf]
      %v426 = vld [vmem:[%s1 + $0x4] sm:$0xf]
      %v427 = vld [vmem:[%s1 + $0x8] sm:$0xf]
      %v428 = vld [vmem:[%s1 + $0xc] sm:$0xf]
      %v429 = vld [vmem:[%s1 + $0x10] sm:$0xf]
      %v430 = vld [vmem:[%s1 + $0x14] sm:$0xf]
      %v431 = vld [vmem:[%s1 + $0x18] sm:$0xf]
      %v432 = vld [vmem:[%s1 + $0x1c] sm:$0xf]
      %v433 = vld [vmem:[%s1 + $0x20] sm:$0xf]
      %v434 = vld [vmem:[%s1 + $0x24] sm:$0xf]
      %v435 = vld [vmem:[%s1 + $0x28] sm:$0xf]
      %v436 = vld [vmem:[%s1 + $0x2c] sm:$0xf]
      %v437 = vld [vmem:[%s1 + $0x30] sm:$0xf]
      %v438 = vld [vmem:[%s1 + $0x34] sm:$0xf]
      %v439 = vld [vmem:[%s1 + $0x38] sm:$0xf]
      %v440 = vld [vmem:[%s1 + $0x3c] sm:$0xf]
      %v441 = vld [vmem:[%s1 + $0x40] sm:$0xf]
      %v442 = vld [vmem:[%s1 + $0x44] sm:$0xf]
      %v443 = vld [vmem:[%s1 + $0x48] sm:$0xf]
      %v444 = vld [vmem:[%s1 + $0x4c] sm:$0xf]
      %v445 = vld [vmem:[%s1 + $0x50] sm:$0xf]
      %v446 = vld [vmem:[%s1 + $0x54] sm:$0xf]
      %v447 = vld [vmem:[%s1 + $0x58] sm:$0xf]
      %v448 = vld [vmem:[%s1 + $0x5c] sm:$0xf]
      %v449 = vld [vmem:[%s1 + $0x60] sm:$0xf]
      %v450 = vld [vmem:[%s2] sm:$0xff]
      %v451 = vld [vmem:[%s2 + $0x8] sm:$0xff]
      %v452 = vld [vmem:[%s2 + $0x10] sm:$0x3f]
      %454 = vset.pattern.permute.xlu0 0
      %455 = vperm.xlu0 %454, %v450
      %v456 = vpop.permute.xlu0 %455
      %459 = vset.pattern.permute.xlu0 0
      %460 = vperm.xlu0 %459, %v451
      %v461 = vpop.permute.xlu0 %460
      %464 = vset.pattern.permute.xlu0 0
      %465 = vperm.xlu0 %464, %v452
      %v466 = vpop.permute.xlu0 %465
      %v493 = vunpack.c.l.b16 %v425
      %v494 = vunpack.c.l.b16 %v426
      %v495 = vunpack.c.l.b16 %v427
      %v496 = vunpack.c.l.b16 %v428
      %v497 = vunpack.c.l.b16 %v429
      %v498 = vunpack.c.l.b16 %v430
      %v499 = vunpack.c.l.b16 %v431
      %v500 = vunpack.c.l.b16 %v432
      %v501 = vunpack.c.l.b16 %v433
      %v502 = vunpack.c.l.b16 %v434
      %v503 = vunpack.c.l.b16 %v435
      %v504 = vunpack.c.l.b16 %v436
      %v505 = vunpack.c.l.b16 %v437
      %v506 = vunpack.c.l.b16 %v438
      %v507 = vunpack.c.l.b16 %v439
      %v508 = vunpack.c.l.b16 %v440
      %v509 = vunpack.c.l.b16 %v441
      %v510 = vunpack.c.l.b16 %v442
      %v511 = vunpack.c.l.b16 %v443
      %v512 = vunpack.c.l.b16 %v444
      %v513 = vunpack.c.l.b16 %v445
      %v514 = vunpack.c.l.b16 %v446
      %v515 = vunpack.c.l.b16 %v447
      %v516 = vunpack.c.l.b16 %v448
      %v517 = vunpack.c.l.b16 %v449
      %v518 = vpack.c.b16 %v494, %v493
      %v519 = vpack.c.b16 %v496, %v495
      %v520 = vpack.c.b16 %v498, %v497
      %v521 = vpack.c.b16 %v500, %v499
      %v522 = vpack.c.b16 %v502, %v501
      %v523 = vpack.c.b16 %v504, %v503
      %v524 = vpack.c.b16 %v506, %v505
      %v525 = vpack.c.b16 %v508, %v507
      %v526 = vpack.c.b16 %v510, %v509
      %v527 = vpack.c.b16 %v512, %v511
      %v528 = vpack.c.b16 %v514, %v513
      %v529 = vpack.c.b16 %v516, %v515
      %v530 = vpack.c.b16 %v517, %v517
      %544 = vxpose.xlu0.c.b16.start [1/8] %v518, 128
      %545 = vxpose.xlu0.c.b16.cont [2/8] %v519, 128
      %546 = vxpose.xlu0.c.b16.cont [3/8] %v520, 128
      %547 = vxpose.xlu0.c.b16.cont [4/8] %v521, 128
      %548 = vxpose.xlu0.c.b16.cont [5/8] %v522, 128
      %549 = vxpose.xlu0.c.b16.cont [6/8] %v523, 128
      %550 = vxpose.xlu0.c.b16.cont [7/8] %v524, 128
      %551 = vxpose.xlu0.c.b16.end [8/8] %v525, 128
      %v552 = vpop.trf.xlu0
      %v553 = vpop.trf.xlu0
      %v554 = vpop.trf.xlu0
      %v555 = vpop.trf.xlu0
      %v556 = vpop.trf.xlu0
      %v557 = vpop.trf.xlu0
      %v558 = vpop.trf.xlu0
      %v559 = vpop.trf.xlu0
      %560 = vxpose.xlu0.c.b16.start [1/8] %v526, 128
      %561 = vxpose.xlu0.c.b16.cont [2/8] %v527, 128
      %562 = vxpose.xlu0.c.b16.cont [3/8] %v528, 128
      %563 = vxpose.xlu0.c.b16.cont [4/8] %v529, 128
      %564 = vxpose.xlu0.c.b16.cont [5/8] %v530, 128
      %565 = vxpose.xlu0.c.b16.cont [6/8] 0, 128
      %566 = vxpose.xlu0.c.b16.cont [7/8] 0, 128
      %567 = vxpose.xlu0.c.b16.end [8/8] 0, 128
      %v568 = vpop.trf.xlu0
      %v569 = vpop.trf.xlu0
      %v570 = vpop.trf.xlu0
      %v571 = vpop.trf.xlu0
      %v572 = vpop.trf.xlu0
      %v573 = vpop.trf.xlu0
      %v574 = vpop.trf.xlu0
      %v575 = vpop.trf.xlu0
      %vm576 = vcmask 588800
      %v578 = vsel %vm576, %v568, 0
      %v581 = vsel %vm576, %v569, 0
      %v584 = vsel %vm576, %v424, 0
      %586 = vmatpush.bf16.xpose.msra.mxu0 0
      %587 = vmatpush.bf16.xpose.msra.mxu0 0
      %588 = vmatpush.bf16.xpose.msra.mxu0 0
      %589 = vmatpush.bf16.xpose.msra.mxu0 0
      %590 = vmatpush.bf16.xpose.msra.mxu0 0
      %591 = vmatpush.bf16.xpose.msra.mxu0 0
      %592 = vmatpush.bf16.xpose.msra.mxu0 0
      %593 = vmatpush.bf16.xpose.msra.mxu0 %v423
      %594 = vmatmul.bf16.gmra.mxu0 %v552
      %v595 = vpop.f32.mrf.mxu0
      %v596 = vadd.f32 %v456, %v595
      %v597 = vpop.f32.mrf.mxu0
      %v598 = vadd.f32 %v461, %v597
      %599 = vmatmul.bf16.gmra.mxu0 %v553
      %v600 = vpop.f32.mrf.mxu0
      %v601 = vadd.f32 %v466, %v600
      %v602 = vpop.f32.mrf.mxu0
      %603 = vdwg.mxu0
      %604 = vmatpush.bf16.xpose.msra.mxu0 0
      %605 = vmatpush.bf16.xpose.msra.mxu0 0
      %606 = vmatpush.bf16.xpose.msra.mxu0 0
      %607 = vmatpush.bf16.xpose.msra.mxu0 0
      %608 = vmatpush.bf16.xpose.msra.mxu0 0
      %609 = vmatpush.bf16.xpose.msra.mxu0 0
      %610 = vmatpush.bf16.xpose.msra.mxu0 0
      %611 = vmatpush.bf16.xpose.msra.mxu0 %v584
      %612 = vmatmul.bf16.gmra.mxu0 %v578
      %v613 = vpop.f32.mrf.mxu0
      %v614 = vadd.f32 %v596, %v613
      %v615 = vpop.f32.mrf.mxu0
      %v616 = vadd.f32 %v598, %v615
      %617 = vmatmul.bf16.gmra.mxu0 %v581
      %v618 = vpop.f32.mrf.mxu0
      %v619 = vadd.f32 %v601, %v618
      %v620 = vpop.f32.mrf.mxu0
      %621 = vdwg.mxu0
      %v622 = vmax.f32 %v614, 0.0
      %v623 = vmax.f32 %v616, 0.0
      %v624 = vmax.f32 %v619, 0.0
      %v625 = vld [vmem:[%s3] sm:$0xf]
      %v626 = vld [vmem:[%s3 + $0x4] sm:$0xf]
      %v627 = vld [vmem:[%s3 + $0x8] sm:$0x7]
      %v628 = vpack.c.bf16 %v623, %v622
      %v629 = vpack.c.bf16 %v624, %v624
      %v630 = vld [vmem:[%s4] sm:$0xff]
      %v631 = vld [vmem:[%s4 + $0x8] sm:$0xff]
      %v632 = vld [vmem:[%s4 + $0x10] sm:$0x3f]
      %634 = vset.pattern.permute.xlu0 0
      %635 = vperm.xlu0 %634, %v630
      %v636 = vpop.permute.xlu0 %635
      %639 = vset.pattern.permute.xlu0 0
      %640 = vperm.xlu0 %639, %v631
      %v641 = vpop.permute.xlu0 %640
      %644 = vset.pattern.permute.xlu0 0
      %645 = vperm.xlu0 %644, %v632
      %v646 = vpop.permute.xlu0 %645
      %v651 = vunpack.c.l.b16 %v625
      %v652 = vunpack.c.l.b16 %v626
      %v653 = vunpack.c.l.b16 %v627
      %v654 = vpack.c.b16 %v652, %v651
      %v655 = vpack.c.b16 %v653, %v653
      %658 = vxpose.xlu0.c.b16.start [1/8] %v654, 128
      %659 = vxpose.xlu0.c.b16.cont [2/8] %v655, 128
      %660 = vxpose.xlu0.c.b16.cont [3/8] 0, 128
      %661 = vxpose.xlu0.c.b16.cont [4/8] 0, 128
      %662 = vxpose.xlu0.c.b16.cont [5/8] 0, 128
      %663 = vxpose.xlu0.c.b16.cont [6/8] 0, 128
      %664 = vxpose.xlu0.c.b16.cont [7/8] 0, 128
      %665 = vxpose.xlu0.c.b16.end [8/8] 0, 128
      %v666 = vpop.trf.xlu0
      %v667 = vpop.trf.xlu0
      %v668 = vpop.trf.xlu0
      %v669 = vpop.trf.xlu0
      %v670 = vpop.trf.xlu0
      %v671 = vpop.trf.xlu0
      %v672 = vpop.trf.xlu0
      %v673 = vpop.trf.xlu0
      %vm674 = vcmask 179200
      %v676 = vsel %vm674, %v666, 0
      %v679 = vsel %vm674, %v667, 0
      %vm681 = vcmask 1042432
      %v683 = vsel %vm681, %v629, 0
      %685 = vmatpush.bf16.msra.mxu0 0
      %686 = vmatpush.bf16.msra.mxu0 0
      %687 = vmatpush.bf16.msra.mxu0 0
      %688 = vmatpush.bf16.msra.mxu0 0
      %689 = vmatpush.bf16.msra.mxu0 0
      %690 = vmatpush.bf16.msra.mxu0 0
      %691 = vmatpush.bf16.msra.mxu0 %v683
      %692 = vmatpush.bf16.msra.mxu0 %v628
      %693 = vmatmul.bf16.gmra.mxu0 %v676
      %v694 = vpop.f32.mrf.mxu0
      %v695 = vadd.f32 %v636, %v694
      %v696 = vpop.f32.mrf.mxu0
      %v697 = vadd.f32 %v641, %v696
      %698 = vmatmul.bf16.gmra.mxu0 %v679
      %v699 = vpop.f32.mrf.mxu0
      %v700 = vadd.f32 %v646, %v699
      %v701 = vpop.f32.mrf.mxu0
      %702 = vdwg.mxu0
      %v703 = vmax.f32 %v695, 0.0
      %v704 = vmax.f32 %v697, 0.0
      %v705 = vmax.f32 %v700, 0.0
      %s706 = scalar_lea.vmem %s3, 12
      %v707 = vld [vmem:[%s706] sm:$0xf]
      %v708 = vld [vmem:[%s706 + $0x4] sm:$0xf]
      %v709 = vld [vmem:[%s706 + $0x8] sm:$0x7]
      %v710 = vpack.c.bf16 %v704, %v703
      %v711 = vpack.c.bf16 %v705, %v705
      %s712 = scalar_lea.vmem %s4, 24
      %v713 = vld [vmem:[%s712] sm:$0xff]
      %v714 = vld [vmem:[%s712 + $0x8] sm:$0xff]
      %v715 = vld [vmem:[%s712 + $0x10] sm:$0x3f]
      %717 = vset.pattern.permute.xlu0 0
      %718 = vperm.xlu0 %717, %v713
      %v719 = vpop.permute.xlu0 %718
      %722 = vset.pattern.permute.xlu0 0
      %723 = vperm.xlu0 %722, %v714
      %v724 = vpop.permute.xlu0 %723
      %727 = vset.pattern.permute.xlu0 0
      %728 = vperm.xlu0 %727, %v715
      %v729 = vpop.permute.xlu0 %728
      %v734 = vunpack.c.l.b16 %v707
      %v735 = vunpack.c.l.b16 %v708
      %v736 = vunpack.c.l.b16 %v709
      %v737 = vpack.c.b16 %v735, %v734
      %v738 = vpack.c.b16 %v736, %v736
      %741 = vxpose.xlu0.c.b16.start [1/8] %v737, 128
      %742 = vxpose.xlu0.c.b16.cont [2/8] %v738, 128
      %743 = vxpose.xlu0.c.b16.cont [3/8] 0, 128
      %744 = vxpose.xlu0.c.b16.cont [4/8] 0, 128
      %745 = vxpose.xlu0.c.b16.cont [5/8] 0, 128
      %746 = vxpose.xlu0.c.b16.cont [6/8] 0, 128
      %747 = vxpose.xlu0.c.b16.cont [7/8] 0, 128
      %748 = vxpose.xlu0.c.b16.end [8/8] 0, 128
      %v749 = vpop.trf.xlu0
      %v750 = vpop.trf.xlu0
      %v751 = vpop.trf.xlu0
      %v752 = vpop.trf.xlu0
      %v753 = vpop.trf.xlu0
      %v754 = vpop.trf.xlu0
      %v755 = vpop.trf.xlu0
      %v756 = vpop.trf.xlu0
      %v758 = vsel %vm674, %v749, 0
      %v761 = vsel %vm674, %v750, 0
      %v764 = vsel %vm681, %v711, 0
      %766 = vmatpush.bf16.msra.mxu0 0
      %767 = vmatpush.bf16.msra.mxu0 0
      %768 = vmatpush.bf16.msra.mxu0 0
      %769 = vmatpush.bf16.msra.mxu0 0
      %770 = vmatpush.bf16.msra.mxu0 0
      %771 = vmatpush.bf16.msra.mxu0 0
      %772 = vmatpush.bf16.msra.mxu0 %v764
      %773 = vmatpush.bf16.msra.mxu0 %v710
      %774 = vmatmul.bf16.gmra.mxu0 %v758
      %v775 = vpop.f32.mrf.mxu0
      %v776 = vadd.f32 %v719, %v775
      %v777 = vpop.f32.mrf.mxu0
      %v778 = vadd.f32 %v724, %v777
      %779 = vmatmul.bf16.gmra.mxu0 %v761
      %v780 = vpop.f32.mrf.mxu0
      %v781 = vadd.f32 %v729, %v780
      %v782 = vpop.f32.mrf.mxu0
      %783 = vdwg.mxu0
      %v784 = vmax.f32 %v776, 0.0
      %v785 = vmax.f32 %v778, 0.0
      %v786 = vmax.f32 %v781, 0.0
      %s787 = scalar_lea.vmem %s3, 24
      %v788 = vld [vmem:[%s787] sm:$0xf]
      %v789 = vld [vmem:[%s787 + $0x4] sm:$0xf]
      %v790 = vld [vmem:[%s787 + $0x8] sm:$0x7]
      %v791 = vpack.c.bf16 %v785, %v784
      %v792 = vpack.c.bf16 %v786, %v786
      %s793 = scalar_lea.vmem %s4, 48
      %v794 = vld [vmem:[%s793] sm:$0xff]
      %v795 = vld [vmem:[%s793 + $0x8] sm:$0xff]
      %v796 = vld [vmem:[%s793 + $0x10] sm:$0x3f]
      %798 = vset.pattern.permute.xlu0 0
      %799 = vperm.xlu0 %798, %v794
      %v800 = vpop.permute.xlu0 %799
      %803 = vset.pattern.permute.xlu0 0
      %804 = vperm.xlu0 %803, %v795
      %v805 = vpop.permute.xlu0 %804
      %808 = vset.pattern.permute.xlu0 0
      %809 = vperm.xlu0 %808, %v796
      %v810 = vpop.permute.xlu0 %809
      %v815 = vunpack.c.l.b16 %v788
      %v816 = vunpack.c.l.b16 %v789
      %v817 = vunpack.c.l.b16 %v790
      %v818 = vpack.c.b16 %v816, %v815
      %v819 = vpack.c.b16 %v817, %v817
      %822 = vxpose.xlu0.c.b16.start [1/8] %v818, 128
      %823 = vxpose.xlu0.c.b16.cont [2/8] %v819, 128
      %824 = vxpose.xlu0.c.b16.cont [3/8] 0, 128
      %825 = vxpose.xlu0.c.b16.cont [4/8] 0, 128
      %826 = vxpose.xlu0.c.b16.cont [5/8] 0, 128
      %827 = vxpose.xlu0.c.b16.cont [6/8] 0, 128
      %828 = vxpose.xlu0.c.b16.cont [7/8] 0, 128
      %829 = vxpose.xlu0.c.b16.end [8/8] 0, 128
      %v830 = vpop.trf.xlu0
      %v831 = vpop.trf.xlu0
      %v832 = vpop.trf.xlu0
      %v833 = vpop.trf.xlu0
      %v834 = vpop.trf.xlu0
      %v835 = vpop.trf.xlu0
      %v836 = vpop.trf.xlu0
      %v837 = vpop.trf.xlu0
      %v839 = vsel %vm674, %v830, 0
      %v842 = vsel %vm674, %v831, 0
      %v845 = vsel %vm681, %v792, 0
      %847 = vmatpush.bf16.msra.mxu0 0
      %848 = vmatpush.bf16.msra.mxu0 0
      %849 = vmatpush.bf16.msra.mxu0 0
      %850 = vmatpush.bf16.msra.mxu0 0
      %851 = vmatpush.bf16.msra.mxu0 0
      %852 = vmatpush.bf16.msra.mxu0 0
      %853 = vmatpush.bf16.msra.mxu0 %v845
      %854 = vmatpush.bf16.msra.mxu0 %v791
      %855 = vmatmul.bf16.gmra.mxu0 %v839
      %v856 = vpop.f32.mrf.mxu0
      %v857 = vadd.f32 %v800, %v856
      %v858 = vpop.f32.mrf.mxu0
      %v859 = vadd.f32 %v805, %v858
      %860 = vmatmul.bf16.gmra.mxu0 %v842
      %v861 = vpop.f32.mrf.mxu0
      %v862 = vadd.f32 %v810, %v861
      %v863 = vpop.f32.mrf.mxu0
      %864 = vdwg.mxu0
      %v865 = vmax.f32 %v857, 0.0
      %v866 = vmax.f32 %v859, 0.0
      %v867 = vmax.f32 %v862, 0.0
      %v868 = vld [vmem:[#allocation2] sm:$0xff]
      %v869 = vld [vmem:[#allocation2 + $0x8] sm:$0xff]
      %v870 = vld [vmem:[#allocation2 + $0x10] sm:$0x3f]
      %vm871 = vcmask 64512
      %v872 = vsel %vm871, %v865, 0.0
      %873 = vadd.xlane.f32.xlu0 %v872
      %v874 = vpop.xlane.xlu0 %873
      %v875 = vsel %vm871, %v866, 0.0
      %876 = vadd.xlane.f32.xlu0 %v875
      %v877 = vpop.xlane.xlu0 %876
      %vm878 = vcmask 62464
      %v879 = vsel %vm878, %v867, 0.0
      %880 = vadd.xlane.f32.xlu0 %v879
      %v881 = vpop.xlane.xlu0 %880
      %v882 = vadd.f32 %v868, %v874
      %v883 = vadd.f32 %v869, %v877
      %v884 = vadd.f32 %v870, %v881
      %vm885 = vcmask 7168
      %886 = vst.msk [vmem:[#allocation2] sm:$0xff] %vm885, %v882
      %887 = vst.msk [vmem:[#allocation2 + $0x8] sm:$0xff] %vm885, %v883
      %vm888 = vcmask 5120
      %889 = vst.msk [vmem:[#allocation2 + $0x10] sm:$0x3f] %vm888, %v884
      // Predicated region
      $region69: #{tpu_custom_call.1} parent=63 // pred_check
        %p890 = pneg %p412
      $region70: #{tpu_custom_call.1} parent=63 // pred_check_branch
        %892 = sbr.rel (%p890) target = $region72
      $region71: #{tpu_custom_call.1} parent=63 // pred_region
        %v893 = vld [vmem:[#allocation2] sm:$0xff]
        %v894 = vld [vmem:[#allocation2 + $0x8] sm:$0xff]
        %v895 = vld [vmem:[#allocation2 + $0x10] sm:$0x3f]
        %v896 = vmul.f32 %v893, 0.125
        %v897 = vmul.f32 %v894, 0.125
        %v898 = vmul.f32 %v895, 0.125
        %v899 = vld [vmem:[%s5] sm:$0xff]
        %v900 = vld [vmem:[%s5 + $0x8] sm:$0xff]
        %v901 = vld [vmem:[%s5 + $0x10] sm:$0x3f]
        %903 = vset.pattern.permute.xlu0 0
        %904 = vperm.xlu0 %903, %v896
        %v905 = vpop.permute.xlu0 %904
        %908 = vset.pattern.permute.xlu0 0
        %909 = vperm.xlu0 %908, %v897
        %v910 = vpop.permute.xlu0 %909
        %913 = vset.pattern.permute.xlu0 0
        %914 = vperm.xlu0 %913, %v898
        %v915 = vpop.permute.xlu0 %914
        %v917 = vmul.f32 %v899, %v905
        %v918 = vmul.f32 %v900, %v910
        %v919 = vmul.f32 %v901, %v915
        %vm920 = vcmask 490496
        %v921 = vsel %vm920, %v917, 0.0
        %v922 = vsel %vm920, %v918, 0.0
        %v923 = vadd.f32 %v921, %v922
        %vm924 = vcmask 488448
        %v925 = vsel %vm924, %v919, 0.0
        %v926 = vadd.f32 %v923, %v925
        %v927 = vrot.slane %v926, 4
        %v928 = vadd.f32 %v926, %v927
        %v929 = vrot.slane %v928, 2
        %v930 = vadd.f32 %v928, %v929
        %v931 = vrot.slane %v930, 1
        %v932 = vadd.f32 %v930, %v931
        %v933 = vld [vmem:[%s6] sm:$0x1]
        %v934 = vadd.f32 %v932, %v933
        %v935 = vld [vmem:[%s7] sm:$0xff]
        %v936 = vld [vmem:[%s7 + $0x8] sm:$0xff]
        %v937 = vld [vmem:[%s7 + $0x10] sm:$0xff]
        %v938 = vld [vmem:[%s7 + $0x18] sm:$0xff]
        %v939 = vld [vmem:[%s7 + $0x20] sm:$0xff]
        %v940 = vld [vmem:[%s7 + $0x28] sm:$0xff]
        %v941 = vld [vmem:[%s7 + $0x30] sm:$0xff]
        %v942 = vld [vmem:[%s7 + $0x38] sm:$0xf]
        %v943 = vld [vmem:[%s8] sm:$0x1]
        %v945 = vsel %vm920, %v934, 0
        %vm947 = vcmask 1043456
        %v949 = vsel %vm947, %v942, 0
        %951 = vmatpush.msra.mxu0 0.0
        %952 = vmatpush.msra.mxu0 0.0
        %953 = vmatpush.msra.mxu0 0.0
        %954 = vmatpush.msra.mxu0 0.0
        %955 = vmatpush.msra.mxu0 0.0
        %956 = vmatpush.msra.mxu0 0.0
        %957 = vmatpush.msra.mxu0 0.0
        %958 = vmatpush.msra.mxu0 0.0
        %959 = vmatpush.msra.mxu0 %v949
        %960 = vmatpush.msra.mxu0 %v941
        %961 = vmatpush.msra.mxu0 %v940
        %962 = vmatpush.msra.mxu0 %v939
        %963 = vmatpush.msra.mxu0 %v938
        %964 = vmatpush.msra.mxu0 %v937
        %965 = vmatpush.msra.mxu0 %v936
        %966 = vmatpush.msra.mxu0 %v935
        %967 = vmatmul.f32.gmra.mxu0 %v945
        %v968 = vpop.f32.mrf.mxu0
        %v969 = vadd.f32 %v943, %v968
        %970 = vdwg.mxu0
        %v971 = vmax.f32 %v969, 0.0
        %v972 = vld [vmem:[%s9] sm:$0x1]
        %v973 = vmul.f32 %v971, %v972
        %vm974 = vcmask 237568
        %v975 = vsel %vm974, %v973, 0.0
        %976 = vadd.xlane.f32.xlu0 %v975
        %v977 = vpop.xlane.xlu0 %976
        %v978 = vld [vmem:[#allocation3] sm:$0x1]
        %v979 = vadd.f32 %v977, %v978
        %v980 = vxor.u32 %v979, 2147483648
        %v981 = vmul.f32 %v980, 1.442695
        %v982 = vpow.pop %v981
        %v983 = vadd.f32 %v982, 1.0
        %v984 = vrcp.pop %v983
        %v985 = vmul.f32 %v983, %v984
        %v986 = vsub.f32 1.0, %v985
        %v987 = vmul.f32 %v984, %v986
        %v988 = vadd.f32 %v984, %v987
        %vm989 = vweird.f32 %v983
        %vm990 = vweird.f32 %v984
        %vm991 = vmor %vm989, %vm990
        %v992 = vsel %vm991, %v984, %v988
        %v993 = vand.u32 2147483647, %v983
        %vm994 = vcmp.eq.f32.partialorder %v993, 8.507059e+37
        %v995 = vand.u32 %v983, 2147483648
        %v996 = vor.u32 1.1754944e-38, %v995
        %v997 = vsel %vm994, %v996, %v992
        %v998 = vmul.f32 1.0, %v997
        %vm999 = vcmask 0
        %1000 = vst.msk [vmem:[%s410] sm:$0x1] %vm999, %v998
      $region72: #{tpu_custom_call.1} parent=63 // pred_fallthru
        _
      %p1001 = scmp.lt.s32.totalorder %s28, 1
      %s1002 = scalar_select %p1001, %s28, 1
      %s1003 = scalar_lea.vmem %s11, %s1002
      // Predicated region
      $region73: #{tpu_custom_call.1} parent=63 // pred_check
        %p1004 = pneg %p292
      $region74: #{tpu_custom_call.1} parent=63 // pred_check_branch
        %1006 = sbr.rel (%p1004) target = $region76
      $region75: #{tpu_custom_call.1} parent=63 // pred_region
        _
      $region76: #{tpu_custom_call.1} parent=63 // pred_fallthru
        _
    $region64: #{tpu_custom_call.1} parent=5 // pred_fallthru
      _
    %p1007 = scmp.le.s32.totalorder 2, %s19
    // Predicated region
    $region77: #{tpu_custom_call.1} parent=5 // pred_check
      %p1008 = pneg %p1007
    $region78: #{tpu_custom_call.1} parent=5 // pred_check_branch
      %1010 = sbr.rel (%p1008) target = $region80
    $region79: #{tpu_custom_call.1} parent=5 // pred_region
      %s1011 = ssub.s32 %s19, 2
      // Predicated region
      $region81: #{tpu_custom_call.1} parent=79 // pred_check
        %p1012 = pneg %p298
      $region82: #{tpu_custom_call.1} parent=79 // pred_check_branch
        %1014 = sbr.rel (%p1012) target = $region84
      $region83: #{tpu_custom_call.1} parent=79 // pred_region
        %p1015 = scmp.lt.s32.totalorder %s30, 1
        %s1016 = scalar_select %p1015, %s30, 1
        %s1017 = scalar_lea.vmem %s11, %s1016
      $region84: #{tpu_custom_call.1} parent=79 // pred_fallthru
        _
    $region80: #{tpu_custom_call.1} parent=5 // pred_fallthru
      _
  $region6: #{tpu_custom_call.1} parent=0 // loop_footer
    %s23 = sadd.s32 1, %s19
  $region7: #{tpu_custom_call.1} parent=0 // loop_footer_branch
    %18 = sbr.rel target = $region3
  $region8: #{tpu_custom_call.1} parent=0 // loop_exit
    _

</llo_original>
